<compile_context>
chip_gen: v5e
topology: v5e:2x2
jax: 0.10.0
libtpu: 0.0.40
codegen_flags: <defaults>
</compile_context>

<pallas_src>
import jax
import jax.numpy as jnp
from jax.experimental import pallas as pl
from jax.experimental.pallas import tpu as pltpu

_LANES = 128          # TPU lane width; compute slab padded to this in vregs.
_BLOCK_B = 4096       # max batch-tile rows (multiple of 8; ~few MiB of VMEM).


def _round_up(n, m):
    return ((n + m - 1) // m) * m


def _linear_relu_kernel(x_ref, w_ref, o_ref):
    """x_ref: (tb, in_f); w_ref: (in_f + 1, 128) = [W.T ; b], lane-padded with
    zeros; o_ref: (tb, out_f) compact output block (full-array last dim)."""
    x = x_ref[...]                       # (tb, in_f)
    w = w_ref[...]                       # (in_f + 1, 128)
    in_f = x.shape[1]
    out_f = o_ref.shape[1]
    y = w[in_f:in_f + 1, :]              # bias row, broadcast on first add
    for k in range(in_f):                # static unroll: 3 VPU FMAs, no MXU
        y = y + x[:, k:k + 1] * w[k:k + 1, :]
    # Compute at full vreg width, store only the useful lanes (compact HBM).
    o_ref[...] = jnp.maximum(y, 0.0)[:, :out_f].astype(o_ref.dtype)


def prepare_params(weight, bias, dtype=jnp.float32):
    """Build the augmented, lane-padded parameter tile ONCE per parameter set:
    rows 0..in_f-1 hold W.T, the last row holds the bias; lanes >= out_f are
    zero (so relu(0) == 0 keeps padded lanes inert)."""
    out_f, in_f = weight.shape
    assert out_f <= _LANES
    w_aug = jnp.zeros((in_f + 1, _LANES), dtype)
    w_aug = w_aug.at[:in_f, :out_f].set(weight.T.astype(dtype))
    w_aug = w_aug.at[in_f, :out_f].set(bias.astype(dtype))
    return w_aug


def net_forward(x, w_aug, out_f, *, block_b=_BLOCK_B):
    """x: (B, in_f) f32; w_aug: (in_f + 1, 128) from prepare_params."""
    B, in_f = x.shape
    assert w_aug.shape == (in_f + 1, _LANES)
    assert out_f <= _LANES

    # >=2 (typically 4) grid steps for mid/large B so v7x's two TensorCores
    # both get work; tile rounded to 8 sublanes and capped for VMEM headroom.
    tb = min(block_b, max(8, _round_up(pl.cdiv(B, 4), 8)))
    grid = (pl.cdiv(B, tb),)

    return pl.pallas_call(
        _linear_relu_kernel,
        out_shape=jax.ShapeDtypeStruct((B, out_f), x.dtype),
        grid=grid,
        in_specs=[
            pl.BlockSpec((tb, in_f), lambda i: (i, 0)),
            pl.BlockSpec((in_f + 1, _LANES), lambda i: (0, 0)),
        ],
        out_specs=pl.BlockSpec((tb, out_f), lambda i: (i, 0)),
        compiler_params=pltpu.CompilerParams(
            dimension_semantics=("parallel",)),
        cost_estimate=pl.CostEstimate(
            flops=2 * B * in_f * out_f,
            transcendentals=0,
            bytes_accessed=B * (in_f + out_f) * 4 + w_aug.size * 4),
    )(x, w_aug)


if __name__ == "__main__":
    key = jax.random.PRNGKey(0)
    k_x, k_w, k_b, k_x2 = jax.random.split(key, 4)

    in_f, out_f = 3, 3
    # Deterministic init mimicking nn.Linear's U(-1/sqrt(in), 1/sqrt(in)).
    bound = 1.0 / jnp.sqrt(jnp.float32(in_f))
    weight = jax.random.uniform(k_w, (out_f, in_f), jnp.float32, -bound, bound)
    bias = jax.random.uniform(k_b, (out_f,), jnp.float32, -bound, bound)

    # Augmented parameter tile built once, next to the parameters (hoisted
    # off the per-call path).
    w_aug = prepare_params(weight, bias)

    def ref_fn(xx):
        return jnp.maximum(xx @ weight.T + bias, 0.0)

    # Small shape matching the module (batch=8, features=3).
    B = 8
    x = jax.random.normal(k_x, (B, in_f), jnp.float32)
    out = net_forward(x, w_aug, out_f)
    jax.block_until_ready(out)
    assert out.shape == (B, out_f)
    assert jnp.allclose(out, ref_fn(x), atol=1e-5, rtol=1e-5)

    # Larger batch exercising the multi-step "parallel" grid path, including
    # a ragged tail (B2 % tb != 0) to re-verify the compact out_spec.
    B2 = 2050
    x2 = jax.random.normal(k_x2, (B2, in_f), jnp.float32)
    out2 = net_forward(x2, w_aug, out_f)
    jax.block_until_ready(out2)
    assert out2.shape == (B2, out_f)
    assert jnp.allclose(out2, ref_fn(x2), atol=1e-5, rtol=1e-5)

    print("KERNEL_OK")
</pallas_src>

<mosaic_0001>
module attributes {stable_mosaic.version = 11 : i64} {
  func.func @_linear_relu_kernel(%arg0: i32, %arg1: memref<8x3xf32, #tpu.memory_space<vmem>>, %arg2: memref<4x128xf32, #tpu.memory_space<vmem>>, %arg3: memref<8x3xf32, #tpu.memory_space<vmem>>) attributes {dimension_semantics = [#tpu.dimension_semantics<parallel>], iteration_bounds = array<i64: 1>, scalar_prefetch = 0 : i64, scratch_operands = 0 : i64, tpu.core_type = #tpu.core_type<tc>, window_params = [{transform_indices = @transform_0, window_bounds = array<i64: 8, 3>}, {pipeline_mode = #tpu.pipeline_mode<synchronous>, transform_indices = @transform_1, window_bounds = array<i64: 4, 128>}, {transform_indices = @transform_2, window_bounds = array<i64: 8, 3>}]} {
    %c0 = arith.constant 0 : index
    %c0_0 = arith.constant 0 : index
    %0 = vector.load %arg1[%c0, %c0_0] : memref<8x3xf32, #tpu.memory_space<vmem>>, vector<8x3xf32>
    %c0_1 = arith.constant 0 : index
    %c0_2 = arith.constant 0 : index
    %1 = vector.load %arg2[%c0_1, %c0_2] : memref<4x128xf32, #tpu.memory_space<vmem>>, vector<4x128xf32>
    %2 = vector.extract_strided_slice %1 {offsets = [3, 0], sizes = [1, 128], strides = [1, 1]} : vector<4x128xf32> to vector<1x128xf32>
    %3 = vector.extract_strided_slice %0 {offsets = [0, 0], sizes = [8, 1], strides = [1, 1]} : vector<8x3xf32> to vector<8x1xf32>
    %4 = vector.extract_strided_slice %1 {offsets = [0, 0], sizes = [1, 128], strides = [1, 1]} : vector<4x128xf32> to vector<1x128xf32>
    %5 = vector.broadcast %3 : vector<8x1xf32> to vector<8x128xf32>
    %6 = vector.broadcast %4 : vector<1x128xf32> to vector<8x128xf32>
    %7 = arith.mulf %5, %6 : vector<8x128xf32>
    %8 = vector.broadcast %2 : vector<1x128xf32> to vector<8x128xf32>
    %9 = arith.addf %8, %7 : vector<8x128xf32>
    %10 = vector.extract_strided_slice %0 {offsets = [0, 1], sizes = [8, 1], strides = [1, 1]} : vector<8x3xf32> to vector<8x1xf32>
    %11 = vector.extract_strided_slice %1 {offsets = [1, 0], sizes = [1, 128], strides = [1, 1]} : vector<4x128xf32> to vector<1x128xf32>
    %12 = vector.broadcast %10 : vector<8x1xf32> to vector<8x128xf32>
    %13 = vector.broadcast %11 : vector<1x128xf32> to vector<8x128xf32>
    %14 = arith.mulf %12, %13 : vector<8x128xf32>
    %15 = arith.addf %9, %14 : vector<8x128xf32>
    %16 = vector.extract_strided_slice %0 {offsets = [0, 2], sizes = [8, 1], strides = [1, 1]} : vector<8x3xf32> to vector<8x1xf32>
    %17 = vector.extract_strided_slice %1 {offsets = [2, 0], sizes = [1, 128], strides = [1, 1]} : vector<4x128xf32> to vector<1x128xf32>
    %18 = vector.broadcast %16 : vector<8x1xf32> to vector<8x128xf32>
    %19 = vector.broadcast %17 : vector<1x128xf32> to vector<8x128xf32>
    %20 = arith.mulf %18, %19 : vector<8x128xf32>
    %21 = arith.addf %15, %20 : vector<8x128xf32>
    %cst = arith.constant 0.000000e+00 : f32
    %22 = vector.broadcast %cst : f32 to vector<8x128xf32>
    %23 = arith.maximumf %21, %22 : vector<8x128xf32>
    %24 = vector.extract_strided_slice %23 {offsets = [0, 0], sizes = [8, 3], strides = [1, 1]} : vector<8x128xf32> to vector<8x3xf32>
    %c0_3 = arith.constant 0 : index
    %c0_4 = arith.constant 0 : index
    %25 = vector.load %arg3[%c0_3, %c0_4] : memref<8x3xf32, #tpu.memory_space<vmem>>, vector<8x3xf32>
    tpu.vector_store %arg3[%c0_3, %c0_4], %24 {strides = array<i32>} : memref<8x3xf32, #tpu.memory_space<vmem>>, vector<8x3xf32>,
    return
  }
  func.func @transform_0(%arg0: i32) -> (i32, i32) {
    %c0_i32 = arith.constant 0 : i32
    %c0_i32_0 = arith.constant 0 : i32
    return %arg0, %c0_i32 : i32, i32
  }
  func.func @transform_1(%arg0: i32) -> (i32, i32) {
    %c0_i32 = arith.constant 0 : i32
    %c0_i32_0 = arith.constant 0 : i32
    %c0_i32_1 = arith.constant 0 : i32
    return %c0_i32, %c0_i32_0 : i32, i32
  }
  func.func @transform_2(%arg0: i32) -> (i32, i32) {
    %c0_i32 = arith.constant 0 : i32
    %c0_i32_0 = arith.constant 0 : i32
    return %arg0, %c0_i32 : i32, i32
  }
}

</mosaic_0001>

<llo_original>
// kernel: tpu_custom_call.1
$region0: #{tpu_custom_call.1}
  #allocation0 [shape = 'u32[]', space=smem, size = 0x4, offset = 0x4, fixed_abs, tag = 'smem constant byte address 0x4 - core index']
  #allocation1 [shape = 'u32[72,128]{1,0:T(1,128)}', space=vmem, size = 0x9000, scoped, tag = 'internal scratch']
  %s0 = inlined_call_operand.vmem [shape: f32[8,3], index: 0, kind: input, shape index: {}]
  %s1 = inlined_call_operand.vmem [shape: f32[4,128], index: 1, kind: input, shape index: {}]
  %s2 = inlined_call_operand.vmem [shape: f32[8,3], index: 2, kind: output, shape index: {}]
  %s3 = sld [smem:[#allocation0]]
  $region18: #{tpu_custom_call.1} parent=0
    _
  %s5 = ssub.s32 1, %s3
  %s6 = scalar_select 0, %s5, %s3
  // Predicated region
  $region2: #{tpu_custom_call.1} parent=0 // pred_check
    _
  $region3: #{tpu_custom_call.1} parent=0 // pred_check_branch
    %8 = sbr.rel (0) target = $region5
  $region4: #{tpu_custom_call.1} parent=0 // pred_region
    _
  $region5: #{tpu_custom_call.1} parent=0 // pred_fallthru
    _
  // Predicated region
  $region6: #{tpu_custom_call.1} parent=0 // pred_check
    _
  $region7: #{tpu_custom_call.1} parent=0 // pred_check_branch
    %10 = sbr.rel (0) target = $region9
  $region8: #{tpu_custom_call.1} parent=0 // pred_region
    _
  $region9: #{tpu_custom_call.1} parent=0 // pred_fallthru
    _
  %v11 = vld [vmem:[%s0] sm:$0xff]
  %v12 = vld [vmem:[%s1] sm:$0xf]
  %14 = vset.pattern.permute.xlu0 0
  %15 = vperm.xlu0 %14, %v11
  %v16 = vpop.permute.xlu0 %15
  %v18 = vperm.slane %v12, 0
  %v19 = vmul.f32 %v16, %v18
  %v20 = vperm.slane %v12, 3
  %v21 = vadd.f32 %v20, %v19
  %22 = vset.pattern.permute.xlu0 1
  %23 = vperm.xlu0 %22, %v11
  %v24 = vpop.permute.xlu0 %23
  %v26 = vperm.slane %v12, 1
  %v27 = vmul.f32 %v24, %v26
  %v28 = vadd.f32 %v21, %v27
  %29 = vset.pattern.permute.xlu0 2
  %30 = vperm.xlu0 %29, %v11
  %v31 = vpop.permute.xlu0 %30
  %v33 = vperm.slane %v12, 2
  %v34 = vmul.f32 %v31, %v33
  %v35 = vadd.f32 %v28, %v34
  %v36 = vmax.f32 %v35, 0.0
  %vm37 = vcmask 23552
  %38 = vst.msk [vmem:[%s2] sm:$0xff] %vm37, %v36
  // Predicated region
  $region10: #{tpu_custom_call.1} parent=0 // pred_check
    _
  $region11: #{tpu_custom_call.1} parent=0 // pred_check_branch
    %40 = sbr.rel (0) target = $region13
  $region12: #{tpu_custom_call.1} parent=0 // pred_region
    _
  $region13: #{tpu_custom_call.1} parent=0 // pred_fallthru
    _
  // Predicated region
  $region14: #{tpu_custom_call.1} parent=0 // pred_check
    _
  $region15: #{tpu_custom_call.1} parent=0 // pred_check_branch
    %42 = sbr.rel (0) target = $region17
  $region16: #{tpu_custom_call.1} parent=0 // pred_region
    _
  $region17: #{tpu_custom_call.1} parent=0 // pred_fallthru
    _

</llo_original>
